<compile_context>
chip_gen: v5e
topology: v5e:2x2
jax: 0.10.0
libtpu: 0.0.40
codegen_flags: <defaults>
</compile_context>

<pallas_src>
import jax
import jax.numpy as jnp
from jax.experimental import pallas as pl
from jax.experimental.pallas import tpu as pltpu


def _round_up(a, b):
    return (a + b - 1) // b * b


def _divisors(n):
    return [d for d in range(1, n + 1) if n % d == 0]


# --------------------------------------------------------------------------
# Kernel
# --------------------------------------------------------------------------
def _upsample_kernel(m_ref, x_ref, o_ref):
    """One grid step: (tb, tg, G*w) input row-groups -> (tb, tg, G*s*s*w).

    The resident 0/1 matrix M folds both the width expansion and the height
    (row) replication of each G-row group into a single MXU matmul whose
    result rows are already in the flat, lane-dense output layout, so the
    store is a full-lane unmasked vst (no relayout of the larger output).
    """
    tb, tg, gw = x_ref.shape
    go = o_ref.shape[-1]
    x2 = x_ref[...].reshape(tb * tg, gw)
    # Single-term 0/1 products: the result is an exact copy of the inputs, so
    # popping the MXU result directly in the output dtype is exact.
    y2 = jnp.dot(x2, m_ref[...], preferred_element_type=o_ref.dtype)
    o_ref[...] = y2.reshape(tb, tg, go)


# --------------------------------------------------------------------------
# Host-side helpers
# --------------------------------------------------------------------------
def _expansion_matrix(g, w, s, dtype):
    """M[k, o] == 1 iff flat output element o of a G-row group is sourced from
    flat input element k of the same group (nearest neighbour, scale s)."""
    ws = w * s
    k = jnp.arange(g * w, dtype=jnp.int32)
    o = jnp.arange(g * s * s * w, dtype=jnp.int32)
    src_row = (o[None, :] // ws) // s      # input row within the group
    src_col = (o[None, :] % ws) // s       # input column
    m = (k[:, None] // w == src_row) & (k[:, None] % w == src_col)
    return m.astype(dtype)


def _pick_row_group(h, w, s):
    """Smallest divisor G of H such that one group's flat output span
    (G*s*s*w elements) is a multiple of 128 lanes -> unmasked output stores
    with the smallest possible matmul contraction (G*w)."""
    for g in _divisors(h):
        if (g * s * s * w) % 128 == 0:
            return g
    # Whole plane in the lane dim: full-extent block dims are always legal.
    return h


def _vmem_budget():
    """Generation-aware budgets (v5e/v6e: 128 MiB VMEM, v7x: 64 MiB)."""
    try:
        cap = int(pltpu.get_tpu_info().vmem_capacity_bytes)
    except Exception:
        cap = 64 << 20                       # conservative fallback
    tile_budget = min(40 << 20, int(cap * 0.55))
    vmem_limit = min(cap, max(tile_budget + (16 << 20), cap * 3 // 4))
    return tile_budget, int(vmem_limit)


def _choose_tiles(nc, hg, gw, go, itemsize, budget):
    """Pick (tb planes, tg row-groups) per step.  Maximizes tile size under
    the VMEM budget (double-buffered in/out tiles + resident M + matmul
    staging all accounted for) while preferring >=2 grid steps with an even
    total so both v7x TensorCores stay busy."""
    sub = 8 * max(1, 4 // itemsize)          # sublane padding granule
    lin = _round_up(gw, 128)
    lout = _round_up(go, 128)

    def cost(tb, tg):
        tgp = _round_up(tg, sub)
        x_tile = tb * tgp * lin * itemsize
        o_tile = tb * tgp * lout * itemsize
        staging = tb * tgp * lout * max(itemsize, 4)   # matmul result
        m_tile = 2 * _round_up(gw, sub) * lout * itemsize
        return 2 * (x_tile + o_tile) + staging + m_tile

    # tg must satisfy the (8,128) rule on the block's second-minor dim.
    tg_cands = [d for d in _divisors(hg) if d % 8 == 0 or d == hg]
    best, best_key = None, None
    for tg in tg_cands:
        for tb in _divisors(nc):
            if cost(tb, tg) > budget:
                continue
            steps = (nc // tb) * (hg // tg)
            key = (steps >= 2, steps % 2 == 0, tb * tg, tg % sub == 0)
            if best is None or key > best_key:
                best, best_key = (tb, tg), key
    return best


def _upsample_xla(x, s):
    # TODO(synk): plain-XLA fallback for (a) non-float dtypes (the 0/1-matrix
    # MXU copy is not exact/available for ints, esp. on v7x) and (b) very
    # wide planes, where a lane-chunked expansion kernel would be needed.
    n, c, h, w = x.shape
    y = jnp.broadcast_to(x[:, :, :, None, :, None], (n, c, h, s, w, s))
    return y.reshape(n, c, h * s, w * s)


# --------------------------------------------------------------------------
# Public wrapper (== UpSample.forward)
# --------------------------------------------------------------------------
def upsample(x, scale_factor: int = 2):
    """Nearest-neighbor upsample of an NCHW tensor by an integer scale."""
    s = int(scale_factor)
    assert s >= 1, "scale_factor must be a positive integer"
    assert x.ndim == 4, "expected NCHW input"
    if s == 1:
        return x

    n, c, h, w = x.shape
    nc, hs, ws = n * c, h * s, w * s
    dt = x.dtype
    itemsize = jnp.dtype(dt).itemsize

    if not jnp.issubdtype(dt, jnp.floating):
        return _upsample_xla(x, s)

    g = _pick_row_group(h, w, s)
    gw, go = g * w, g * s * s * w
    hg = h // g

    # Guard: huge contraction / expansion matrix (very wide planes).
    m_bytes = _round_up(gw, 8) * _round_up(go, 128) * itemsize
    if gw > 512 or m_bytes > (8 << 20):
        return _upsample_xla(x, s)

    tile_budget, vmem_limit = _vmem_budget()
    tiles = _choose_tiles(nc, hg, gw, go, itemsize, tile_budget)
    if tiles is None:
        return _upsample_xla(x, s)
    tb, tg = tiles

    m = _expansion_matrix(g, w, s, dt)
    x_flat = x.reshape(nc, hg, gw)           # contiguous -> free reshape

    in_bytes = nc * h * w * itemsize
    out_bytes = nc * hs * ws * itemsize
    cost = pl.CostEstimate(
        flops=2 * gw * nc * hs * ws,
        transcendentals=0,
        bytes_accessed=in_bytes + out_bytes + m.size * itemsize,
    )

    out_flat = pl.pallas_call(
        _upsample_kernel,
        out_shape=jax.ShapeDtypeStruct((nc, hg, go), dt),
        grid_spec=pltpu.PrefetchScalarGridSpec(
            num_scalar_prefetch=0,
            grid=(nc // tb, hg // tg),
            in_specs=[
                # Expansion matrix: constant index_map -> fetched once and
                # kept resident in VMEM across all grid steps.
                pl.BlockSpec((gw, go), lambda i, j: (0, 0)),
                pl.BlockSpec((tb, tg, gw), lambda i, j: (i, j, 0)),
            ],
            out_specs=pl.BlockSpec((tb, tg, go), lambda i, j: (i, j, 0)),
        ),
        compiler_params=pltpu.CompilerParams(
            dimension_semantics=("parallel", "parallel"),
            vmem_limit_bytes=vmem_limit,
        ),
        cost_estimate=cost,
    )(m, x_flat)

    # (nc, h//G, G*s*s*w) is exactly the row-major flat NCHW output.
    return out_flat.reshape(n, c, hs, ws)


def _reference(x, s=2):
    n, c, h, w = x.shape
    y = jnp.broadcast_to(x[:, :, :, None, :, None], (n, c, h, s, w, s))
    return y.reshape(n, c, h * s, w * s)


if __name__ == "__main__":
    key = jax.random.PRNGKey(0)
    x = jax.random.normal(key, (2, 4, 16, 16), dtype=jnp.float32)

    y = upsample(x, scale_factor=2)
    y = jax.block_until_ready(y)

    y_ref = _reference(x, 2)
    assert y.shape == (2, 4, 32, 32), y.shape
    assert jnp.allclose(y, y_ref, atol=1e-6, rtol=1e-6), "mismatch vs reference"

    print("KERNEL_OK")
</pallas_src>

<mosaic_0001>
module attributes {stable_mosaic.version = 11 : i64} {
  func.func @_upsample_kernel(%arg0: i32, %arg1: i32, %arg2: memref<32x128xf32, #tpu.memory_space<vmem>>, %arg3: memref<4x8x32xf32, #tpu.memory_space<vmem>>, %arg4: memref<4x8x128xf32, #tpu.memory_space<vmem>>) attributes {dimension_semantics = [#tpu.dimension_semantics<parallel>, #tpu.dimension_semantics<parallel>], iteration_bounds = array<i64: 2, 1>, scalar_prefetch = 0 : i64, scratch_operands = 0 : i64, tpu.core_type = #tpu.core_type<tc>, window_params = [{pipeline_mode = #tpu.pipeline_mode<synchronous>, transform_indices = @transform_0, window_bounds = array<i64: 32, 128>}, {transform_indices = @transform_1, window_bounds = array<i64: 4, 8, 32>}, {transform_indices = @transform_2, window_bounds = array<i64: 4, 8, 128>}]} {
    %c0 = arith.constant 0 : index
    %c0_0 = arith.constant 0 : index
    %c0_1 = arith.constant 0 : index
    %0 = vector.load %arg3[%c0, %c0_0, %c0_1] : memref<4x8x32xf32, #tpu.memory_space<vmem>>, vector<4x8x32xf32>
    %1 = vector.shape_cast %0 : vector<4x8x32xf32> to vector<32x32xf32>
    %c0_2 = arith.constant 0 : index
    %c0_3 = arith.constant 0 : index
    %2 = vector.load %arg2[%c0_2, %c0_3] : memref<32x128xf32, #tpu.memory_space<vmem>>, vector<32x128xf32>
    %cst = arith.constant dense<0.000000e+00> : vector<32x128xf32>
    %3 = tpu.matmul %1, %2, %cst {dimension_numbers = #tpu.dot_dimension_numbers<[1], [0], [0], [1], [0, 0, 1, 1], [], []>} : vector<32x32xf32>, vector<32x128xf32>, vector<32x128xf32> -> vector<32x128xf32>
    %4 = vector.shape_cast %3 : vector<32x128xf32> to vector<4x8x128xf32>
    %c0_4 = arith.constant 0 : index
    %c0_5 = arith.constant 0 : index
    %c0_6 = arith.constant 0 : index
    %5 = vector.load %arg4[%c0_4, %c0_5, %c0_6] : memref<4x8x128xf32, #tpu.memory_space<vmem>>, vector<4x8x128xf32>
    tpu.vector_store %arg4[%c0_4, %c0_5, %c0_6], %4 {strides = array<i32>} : memref<4x8x128xf32, #tpu.memory_space<vmem>>, vector<4x8x128xf32>,
    return
  }
  func.func @transform_0(%arg0: i32, %arg1: i32) -> (i32, i32) {
    %c0_i32 = arith.constant 0 : i32
    %c0_i32_0 = arith.constant 0 : i32
    %c0_i32_1 = arith.constant 0 : i32
    return %c0_i32, %c0_i32_0 : i32, i32
  }
  func.func @transform_1(%arg0: i32, %arg1: i32) -> (i32, i32, i32) {
    %c0_i32 = arith.constant 0 : i32
    %c0_i32_0 = arith.constant 0 : i32
    return %arg0, %arg1, %c0_i32 : i32, i32, i32
  }
  func.func @transform_2(%arg0: i32, %arg1: i32) -> (i32, i32, i32) {
    %c0_i32 = arith.constant 0 : i32
    %c0_i32_0 = arith.constant 0 : i32
    return %arg0, %arg1, %c0_i32 : i32, i32, i32
  }
}

</mosaic_0001>

<llo_original>
// kernel: tpu_custom_call.1
$region0: #{tpu_custom_call.1}
  #allocation0 [shape = 'u32[]', space=smem, size = 0x4, offset = 0x4, fixed_abs, tag = 'smem constant byte address 0x4 - core index']
  #allocation1 [shape = 'u32[72,128]{1,0:T(1,128)}', space=vmem, size = 0x9000, scoped, tag = 'internal scratch']
  %s0 = inlined_call_operand.hbm [shape: f32[32,128], index: 0, kind: input, shape index: {}]
  %s1 = inlined_call_operand.hbm [shape: f32[8,8,32], index: 1, kind: input, shape index: {}]
  %s2 = inlined_call_operand.hbm [shape: f32[8,8,128], index: 2, kind: output, shape index: {}]
  %s3 = sld [smem:[#allocation0]]
  $region49: #{tpu_custom_call.1} parent=0
    _
  %s5 = ssub.s32 1, %s3
  %s6 = scalar_select 0, %s5, %s3
  $region1: #{tpu_custom_call.1} parent=0
    #allocation2 [shape = 'u8[16384]{0}', space=vmem, size = 0x4000, scoped, tag = 'input window, operand 0, single buffered']
    #allocation3 [shape = 's32[2]{0}', space=sflag, size = 0x8, scoped, tag = 'scoped memory for tpu_custom_call.1']
    #allocation4 [shape = 's32[2]{0}', space=sflag, size = 0x8, scoped, tag = 'scoped memory for tpu_custom_call.1']
    #allocation5 [shape = 'u8[32768]{0}', space=vmem, size = 0x8000, scoped, tag = 'input window, operand 1']
    #allocation6 [shape = 's32[2]{0}', space=sflag, size = 0x8, scoped, tag = 'scoped memory for tpu_custom_call.1']
    #allocation7 [shape = 'u8[32768]{0}', space=vmem, size = 0x8000, scoped, tag = 'output window, operand 0']
    %7 = vsyncpa [#allocation3], 0
    %8 = vsyncpa [#allocation6], 0
    %s9 = scalar_lea.sflag [#allocation6], 1
    %10 = vsyncpa %s9, 0
    %11 = vsyncpa [#allocation4], 0
    %s12 = scalar_lea.sflag [#allocation4], 1
    %13 = vsyncpa %s12, 0
    loop: start=0, step=1, limit=4
    $region2: #{tpu_custom_call.1} parent=1 // loop_pre_header
      _
    $region3: #{tpu_custom_call.1} parent=1 // loop_header
      %s15 = sphi 0, %s19
      %p16 = scmp.ge.s32.totalorder %s15, 4
      %s22 = sphi 0, %s34
      %s23 = sphi 0, %s30
      %s24 = sphi 0, %s22
      %s25 = sphi 0, %s23
      %s26 = sphi 0, %s24
      %s27 = sphi 0, %s25
      %s35 = sphi 0, %s35
      %s37 = sphi 0, %s35
      %s38 = sphi 0, %s37
      %s52 = sphi 0, %s38
      %s60 = sphi 0, %s62
      %s63 = sphi 0, %s60
      %s64 = sphi 0, %s63
      %s80 = sphi 0, %s64
      %s88 = sphi 0, %s90
      %s91 = sphi 0, %s88
      %s92 = sphi 0, %s91
      %s108 = sphi 0, %s92
    $region4: #{tpu_custom_call.1} parent=1 // loop_header_branch
      %18 = sbr.rel (%p16) target = $region8
    $region5: #{tpu_custom_call.1} parent=1 // loop_body
      %s20 = ssub.s32 %s15, 1
      %s21 = ssub.s32 %s15, 2
      %s28 = sadd.s32 1, %s23
      %p29 = scmp.ge.s32.totalorder %s28, 1
      %s30 = scalar_select %p29, 0, %s28
      %s31 = sadd.s32 1, %s22
      %s32 = scalar_select %p29, %s31, %s22
      %p33 = scmp.ge.s32.totalorder %s32, 2
      %s34 = scalar_select %p33, 0, %s32
      %s36 = sadd.s32 %s35, 1
      %p39 = scmp.eq.s32.totalorder %s15, 1
      %p40 = scmp.ne.s32.totalorder %s35, %s37
      %p41 = scmp.eq.s32.totalorder %s15, 0
      %p42 = por %p40, %p41
      %p43 = scmp.ne.s32.totalorder %s35, %s37
      %p44 = scmp.eq.s32.totalorder %s20, 1
      %p45 = por %p43, %p44
      %p46 = scmp.ne.s32.totalorder %s37, %s38
      %p47 = scmp.eq.s32.totalorder %s20, 0
      %p48 = por %p46, %p47
      %p49 = scmp.ne.s32.totalorder %s37, %s38
      %p50 = scmp.eq.s32.totalorder %s21, 1
      %p51 = por %p49, %p50
      %p53 = scmp.ne.s32.totalorder %s38, %s52
      %p54 = scmp.eq.s32.totalorder %s21, 0
      %p55 = por %p53, %p54
      %s56 = ssub.s32 %s22, %s34
      %s57 = ssub.s32 %s23, %s30
      %s58 = sor.u32 %s56, %s57
      %p59 = scmp.eq.s32.totalorder %s58, 0
      %s61 = sadd.s32 %s60, 1
      %s62 = scalar_select %p59, %s60, %s61
      %p65 = pneg %p59
      %p66 = scmp.eq.s32.totalorder %s15, 1
      %p67 = por %p65, %p66
      %p68 = scmp.ne.s32.totalorder %s60, %s63
      %p69 = scmp.eq.s32.totalorder %s15, 0
      %p70 = por %p68, %p69
      %p71 = scmp.ne.s32.totalorder %s60, %s63
      %p72 = scmp.eq.s32.totalorder %s20, 1
      %p73 = por %p71, %p72
      %p74 = scmp.ne.s32.totalorder %s63, %s64
      %p75 = scmp.eq.s32.totalorder %s20, 0
      %p76 = por %p74, %p75
      %p77 = scmp.ne.s32.totalorder %s63, %s64
      %p78 = scmp.eq.s32.totalorder %s21, 1
      %p79 = por %p77, %p78
      %p81 = scmp.ne.s32.totalorder %s64, %s80
      %p82 = scmp.eq.s32.totalorder %s21, 0
      %p83 = por %p81, %p82
      %s84 = ssub.s32 %s22, %s34
      %s85 = ssub.s32 %s23, %s30
      %s86 = sor.u32 %s84, %s85
      %p87 = scmp.eq.s32.totalorder %s86, 0
      %s89 = sadd.s32 %s88, 1
      %s90 = scalar_select %p87, %s88, %s89
      %p93 = pneg %p87
      %p94 = scmp.eq.s32.totalorder %s15, 1
      %p95 = por %p93, %p94
      %p96 = scmp.ne.s32.totalorder %s88, %s91
      %p97 = scmp.eq.s32.totalorder %s15, 0
      %p98 = por %p96, %p97
      %p99 = scmp.ne.s32.totalorder %s88, %s91
      %p100 = scmp.eq.s32.totalorder %s20, 1
      %p101 = por %p99, %p100
      %p102 = scmp.ne.s32.totalorder %s91, %s92
      %p103 = scmp.eq.s32.totalorder %s20, 0
      %p104 = por %p102, %p103
      %p105 = scmp.ne.s32.totalorder %s91, %s92
      %p106 = scmp.eq.s32.totalorder %s21, 1
      %p107 = por %p105, %p106
      %p109 = scmp.ne.s32.totalorder %s92, %s108
      %p110 = scmp.eq.s32.totalorder %s21, 0
      %p111 = por %p109, %p110
      %p112 = scmp.le.s32.totalorder 1, %s15
      %p113 = scmp.lt.s32.totalorder %s15, 3
      %p114 = pnand %p112, %p113
      %p115 = pneg %p114
      // Predicated region
      $region9: #{tpu_custom_call.1} parent=5 // pred_check
        _
      $region10: #{tpu_custom_call.1} parent=5 // pred_check_branch
        %117 = sbr.rel (%p114) target = $region12
      $region11: #{tpu_custom_call.1} parent=5 // pred_region
        %s118 = ssub.s32 %s15, 1
        // Predicated region
        $region13: #{tpu_custom_call.1} parent=11 // pred_check
          %p119 = pneg %p48
        $region14: #{tpu_custom_call.1} parent=11 // pred_check_branch
          %121 = sbr.rel (%p119) target = $region16
        $region15: #{tpu_custom_call.1} parent=11 // pred_region
          %123 = vsyncadd [#allocation3], 0
          %s124 = sshll.u32 %s0, 4
          %s125 = int_to_ptr.hbm [resolvable:$true] %s124
          %s126 = sshll.u32 [#allocation2], 4
          %s127 = int_to_ptr.vmem [resolvable:$true] %s126
          %132 = dma.hbm_to_vmem [thread:$0]  %s125, 512, %s127, [#allocation3], 128, 128, 8
        $region16: #{tpu_custom_call.1} parent=11 // pred_fallthru
          _
      $region12: #{tpu_custom_call.1} parent=5 // pred_fallthru
        _
      %p133 = scmp.lt.s32.totalorder %s15, 2
      // Predicated region
      $region17: #{tpu_custom_call.1} parent=5 // pred_check
        %p134 = pneg %p133
      $region18: #{tpu_custom_call.1} parent=5 // pred_check_branch
        %136 = sbr.rel (%p134) target = $region20
      $region19: #{tpu_custom_call.1} parent=5 // pred_region
        // Predicated region
        $region21: #{tpu_custom_call.1} parent=19 // pred_check
          %p137 = pneg %p70
        $region22: #{tpu_custom_call.1} parent=19 // pred_check_branch
          %139 = sbr.rel (%p137) target = $region24
        $region23: #{tpu_custom_call.1} parent=19 // pred_region
          %s140 = sand.u32 %s60, 1
          %s141 = scalar_lea.sflag [#allocation6], %s140
          %s142 = sand.u32 %s60, 1
          %s143 = smul.addr %s142, 32
          %s144 = scalar_lea.vmem [#allocation5], %s143
          %s145 = smul.u32 4, %s22
          %147 = vsyncadd %s141, 0
          %s148 = sadd.s32 %s23, %s145
          %s149 = smul.addr %s148, 8
          %s150 = scalar_lea.hbm %s1, %s149
          %s151 = sshll.u32 %s150, 4
          %s152 = int_to_ptr.hbm [resolvable:$true] %s151
          %s153 = sshll.u32 %s144, 4
          %s154 = int_to_ptr.vmem [resolvable:$true] %s153
          %159 = dma.hbm_to_vmem [thread:$0]  %s152, 512, %s154, %s141, 128, 128, 8
        $region24: #{tpu_custom_call.1} parent=19 // pred_fallthru
          _
      $region20: #{tpu_custom_call.1} parent=5 // pred_fallthru
        _
      %p160 = scmp.le.s32.totalorder 1, %s15
      %p161 = scmp.lt.s32.totalorder %s15, 3
      %p162 = pnand %p160, %p161
      %p163 = pneg %p162
      // Predicated region
      $region25: #{tpu_custom_call.1} parent=5 // pred_check
        _
      $region26: #{tpu_custom_call.1} parent=5 // pred_check_branch
        %165 = sbr.rel (%p162) target = $region28
      $region27: #{tpu_custom_call.1} parent=5 // pred_region
        %s166 = ssub.s32 %s15, 1
        // Predicated region
        $region29: #{tpu_custom_call.1} parent=27 // pred_check
          %p167 = pneg %p48
        $region30: #{tpu_custom_call.1} parent=27 // pred_check_branch
          %169 = sbr.rel (%p167) target = $region32
        $region31: #{tpu_custom_call.1} parent=27 // pred_region
          %171 = dma.done [#allocation3], 512
        $region32: #{tpu_custom_call.1} parent=27 // pred_fallthru
          _
        %s172 = sand.u32 %s63, 1
        %s173 = scalar_lea.sflag [#allocation6], %s172
        %s174 = sand.u32 %s63, 1
        %s175 = smul.addr %s174, 32
        %s176 = scalar_lea.vmem [#allocation5], %s175
        // Predicated region
        $region33: #{tpu_custom_call.1} parent=27 // pred_check
          %p177 = pneg %p76
        $region34: #{tpu_custom_call.1} parent=27 // pred_check_branch
          %179 = sbr.rel (%p177) target = $region36
        $region35: #{tpu_custom_call.1} parent=27 // pred_region
          %181 = dma.done %s173, 512
        $region36: #{tpu_custom_call.1} parent=27 // pred_fallthru
          _
        %p182 = pneg %p48
        %p183 = pneg %p45
        %s184 = sand.u32 %s63, 1
        %s185 = scalar_lea.sflag [#allocation6], %s184
        %s186 = sand.u32 %s63, 1
        %s187 = smul.addr %s186, 32
        %s188 = scalar_lea.vmem [#allocation5], %s187
        %p189 = pneg %p76
        %p190 = pneg %p73
        %p191 = pneg %p104
        %p192 = pneg %p101
        %s193 = sand.u32 %s91, 1
        %s194 = scalar_lea.sflag [#allocation4], %s193
        %s195 = sand.u32 %s91, 1
        %s196 = smul.addr %s195, 32
        %s197 = scalar_lea.vmem [#allocation7], %s196
        %s198 = smul.u32 4, %s24
        %s199 = smul.u32 4, %s24
        %v200 = vld [vmem:[%s176] sm:$0xff]
        %v201 = vld [vmem:[%s176 + $0x8] sm:$0xff]
        %v202 = vld [vmem:[%s176 + $0x10] sm:$0xff]
        %v203 = vld [vmem:[%s176 + $0x18] sm:$0xff]
        %v204 = vld [vmem:[#allocation2] sm:$0xff]
        %v205 = vld [vmem:[#allocation2 + $0x8] sm:$0xff]
        %v206 = vld [vmem:[#allocation2 + $0x10] sm:$0xff]
        %v207 = vld [vmem:[#allocation2 + $0x18] sm:$0xff]
        %vm208 = vcmask 261120
        %v210 = vsel %vm208, %v200, 0
        %v213 = vsel %vm208, %v201, 0
        %v216 = vsel %vm208, %v202, 0
        %v219 = vsel %vm208, %v203, 0
        %221 = vmatpush.msra.mxu0 0.0
        %222 = vmatpush.msra.mxu0 0.0
        %223 = vmatpush.msra.mxu0 0.0
        %224 = vmatpush.msra.mxu0 0.0
        %225 = vmatpush.msra.mxu0 0.0
        %226 = vmatpush.msra.mxu0 0.0
        %227 = vmatpush.msra.mxu0 0.0
        %228 = vmatpush.msra.mxu0 0.0
        %229 = vmatpush.msra.mxu0 0.0
        %230 = vmatpush.msra.mxu0 0.0
        %231 = vmatpush.msra.mxu0 0.0
        %232 = vmatpush.msra.mxu0 0.0
        %233 = vmatpush.msra.mxu0 %v207
        %234 = vmatpush.msra.mxu0 %v206
        %235 = vmatpush.msra.mxu0 %v205
        %236 = vmatpush.msra.mxu0 %v204
        %237 = vmatmul.f32.gmra.mxu0 %v210
        %v238 = vpop.f32.mrf.mxu0
        %v239 = vadd.f32 0.0, %v238
        %240 = vmatmul.f32.gmra.mxu0 %v213
        %v241 = vpop.f32.mrf.mxu0
        %v242 = vadd.f32 0.0, %v241
        %243 = vmatmul.f32.gmra.mxu0 %v216
        %v244 = vpop.f32.mrf.mxu0
        %v245 = vadd.f32 0.0, %v244
        %246 = vmatmul.f32.gmra.mxu0 %v219
        %v247 = vpop.f32.mrf.mxu0
        %v248 = vadd.f32 0.0, %v247
        %249 = vdwg.mxu0
        %250 = vst [vmem:[%s197] sm:$0xff] %v239
        %251 = vst [vmem:[%s197 + $0x8] sm:$0xff] %v242
        %252 = vst [vmem:[%s197 + $0x10] sm:$0xff] %v245
        %253 = vst [vmem:[%s197 + $0x18] sm:$0xff] %v248
        %s254 = sand.u32 %s91, 1
        %s255 = scalar_lea.sflag [#allocation4], %s254
        %s256 = sand.u32 %s91, 1
        %s257 = smul.addr %s256, 32
        %s258 = scalar_lea.vmem [#allocation7], %s257
        // Predicated region
        $region37: #{tpu_custom_call.1} parent=27 // pred_check
          %p259 = pneg %p101
        $region38: #{tpu_custom_call.1} parent=27 // pred_check_branch
          %261 = sbr.rel (%p259) target = $region40
        $region39: #{tpu_custom_call.1} parent=27 // pred_region
          %s262 = smul.u32 4, %s24
          %264 = vsyncadd %s255, 0
          %s265 = sadd.s32 %s25, %s262
          %s266 = smul.addr %s265, 8
          %s267 = scalar_lea.hbm %s2, %s266
          %s268 = sshll.u32 %s258, 4
          %s269 = int_to_ptr.vmem [resolvable:$true] %s268
          %s270 = sshll.u32 %s267, 4
          %s271 = int_to_ptr.hbm [resolvable:$true] %s270
          %276 = dma.vmem_to_hbm [thread:$0]  %s269, 512, %s271, %s255, 128, 128, 8
        $region40: #{tpu_custom_call.1} parent=27 // pred_fallthru
          _
      $region28: #{tpu_custom_call.1} parent=5 // pred_fallthru
        _
      %p277 = scmp.le.s32.totalorder 2, %s15
      // Predicated region
      $region41: #{tpu_custom_call.1} parent=5 // pred_check
        %p278 = pneg %p277
      $region42: #{tpu_custom_call.1} parent=5 // pred_check_branch
        %280 = sbr.rel (%p278) target = $region44
      $region43: #{tpu_custom_call.1} parent=5 // pred_region
        %s281 = ssub.s32 %s15, 2
        // Predicated region
        $region45: #{tpu_custom_call.1} parent=43 // pred_check
          %p282 = pneg %p107
        $region46: #{tpu_custom_call.1} parent=43 // pred_check_branch
          %284 = sbr.rel (%p282) target = $region48
        $region47: #{tpu_custom_call.1} parent=43 // pred_region
          %s285 = sand.u32 %s92, 1
          %s286 = scalar_lea.sflag [#allocation4], %s285
          %s287 = sand.u32 %s92, 1
          %s288 = smul.addr %s287, 32
          %s289 = scalar_lea.vmem [#allocation7], %s288
          %291 = dma.done %s286, 512
        $region48: #{tpu_custom_call.1} parent=43 // pred_fallthru
          _
      $region44: #{tpu_custom_call.1} parent=5 // pred_fallthru
        _
    $region6: #{tpu_custom_call.1} parent=1 // loop_footer
      %s19 = sadd.s32 1, %s15
    $region7: #{tpu_custom_call.1} parent=1 // loop_footer_branch
      %14 = sbr.rel target = $region3
    $region8: #{tpu_custom_call.1} parent=1 // loop_exit
      _
    %292 = vsyncpa [#allocation3], 1
    %s293 = scalar_lea.sflag [#allocation3], 1
    %294 = vsyncpa %s293, 1
    %295 = vsyncpa [#allocation6], 1
    %s296 = scalar_lea.sflag [#allocation6], 1
    %297 = vsyncpa %s296, 1
    %298 = vsyncpa [#allocation4], 1
    %s299 = scalar_lea.sflag [#allocation4], 1
    %300 = vsyncpa %s299, 1

</llo_original>
